<compile_context>
chip_gen: v7x
topology: tpu7x:2x2x1
jax: 0.10.0
libtpu: 0.0.40
codegen_flags: <defaults>
</compile_context>

<pallas_src>
import jax
import jax.numpy as jnp
from jax.experimental import pallas as pl
from jax.experimental.pallas import tpu as pltpu


def _choose_batch_tile(b, nn, itemsize):
    """Pick the batch-tile TB.

    Constraints: TB == B (single full block) or TB a multiple of 128 (lane axis of
    the (2, B) stats output and sublane axis of the inputs). Target ~2 MiB per
    input block so (adj, mask, masked) x 2 pipeline buffers stay well under the
    scoped-VMEM default on v5e/v6e/v7x. Assumes NAS-style small N.
    """
    target_bytes = 2 << 20
    tb = (target_bytes // max(1, nn * itemsize)) // 128 * 128
    tb = max(128, min(4096, tb))
    if b <= tb:
        return b          # single full-batch block (demo / small B)
    return tb


def _arch_metrics_kernel(adj_ref, mask_ref, coef_ref, masked_ref, stats_ref):
    # adj/mask blocks: (TB, N*N); coef: (2, N*N); masked: (TB, N*N); stats: (2, TB)
    adj = adj_ref[...]
    masked = adj * mask_ref[...].astype(adj.dtype)
    masked_ref[...] = masked                              # full-tile, lane-dense store

    edges = (masked > 0.5).astype(jnp.float32)            # (TB, NN), 0/1

    # One small MXU matmul replaces both lane reductions AND lands the per-arch
    # results directly on the lane axis (lane-dense (2, TB) output block):
    #   coef row 0: ones            -> edge count per arch
    #   coef row 1: lower-tri mask  -> # of self-loop / lower-triangular edges
    raw = jax.lax.dot_general(
        coef_ref[...], edges,
        dimension_numbers=(((1,), (1,)), ((), ())),       # contract over N*N
        preferred_element_type=jnp.float32)                # (2, TB)

    row = jax.lax.broadcasted_iota(jnp.int32, raw.shape, 0)
    valid = (raw < 0.5).astype(jnp.float32)               # robust: raw is an integer count
    stats_ref[...] = jnp.where(row == 0, raw, valid)      # row0: counts, row1: valid flag


@jax.jit
def _arch_metrics_impl(adj, mask):
    B, N, _ = adj.shape
    NN = N * N
    itemsize = jnp.dtype(adj.dtype).itemsize
    TB = _choose_batch_tile(B, NN, itemsize)

    adj2 = adj.reshape(B, NN)                              # free reshape (contiguous)
    if not jnp.issubdtype(mask.dtype, jnp.floating):
        mask = mask.astype(adj.dtype)                      # bool/int masks -> float once
    mask2 = mask.reshape(B, NN)

    # Constant reduction coefficients: [ones ; flattened (row >= col) lower-tri mask].
    r = jax.lax.broadcasted_iota(jnp.int32, (N, N), 0)
    c = jax.lax.broadcasted_iota(jnp.int32, (N, N), 1)
    lower = (r >= c).astype(jnp.float32).reshape(1, NN)
    coef = jnp.concatenate([jnp.ones((1, NN), jnp.float32), lower], axis=0)  # (2, NN)

    grid = (pl.cdiv(B, TB),)
    masked2, stats = pl.pallas_call(
        _arch_metrics_kernel,
        grid=grid,
        in_specs=[
            pl.BlockSpec((TB, NN), lambda i: (i, 0)),      # adj
            pl.BlockSpec((TB, NN), lambda i: (i, 0)),      # mask
            pl.BlockSpec((2, NN), lambda i: (0, 0)),       # coef (constant block)
        ],
        out_specs=[
            pl.BlockSpec((TB, NN), lambda i: (i, 0)),      # masked adjacency
            pl.BlockSpec((2, TB), lambda i: (0, i)),       # lane-dense per-arch stats
        ],
        out_shape=[
            jax.ShapeDtypeStruct((B, NN), adj.dtype),
            jax.ShapeDtypeStruct((2, B), jnp.float32),
        ],
        compiler_params=pltpu.CompilerParams(
            dimension_semantics=("parallel",)),            # megacore on v7x, no-op elsewhere
    )(adj2, mask2, coef)

    masked_adj = masked2.reshape(B, N, N)
    edge_count = stats[0][:, None]                          # (B, 1)
    valid_flag = stats[1][:, None]                          # (B, 1)
    return masked_adj, edge_count, valid_flag


def arch_metrics_pallas(adj, mask):
    """Returns (masked_adj [B,N,N] in adj.dtype, edge_count [B,1] f32, valid_flag [B,1] f32)."""
    return _arch_metrics_impl(adj, mask)


class SamplingArchMetricsMeta:
    """JAX/Pallas port of the PyTorch module's forward-pass tensor semantics."""

    def __init__(self, search_space="nasbench201", exp_name="exp"):
        self.exp_name = exp_name
        self.search_space = search_space
        # TODO(synk): train_arch_str_list / NAS-Bench lookup tables are host-side string data.

    def forward(self, arch_list, adj, mask, this_sample_dir=None, test=False,
                timestep=None, check_dataname="cifar10"):
        masked_adj, edge_count, valid_flag = arch_metrics_pallas(adj, mask)
        # TODO(synk): arch-string uniqueness / accuracy / FLOPs / params / latency dicts and
        #             the valid_unique_archs.txt / final_.txt writes are host I/O (no Pallas form).
        return (masked_adj, edge_count, valid_flag, arch_list)

    __call__ = forward


if __name__ == "__main__":
    key = jax.random.PRNGKey(0)
    B, N = 2, 8  # batch of sampled archs, num_nodes per arch cell

    k1, k2 = jax.random.split(key)
    adj = jax.random.uniform(k1, (B, N, N), dtype=jnp.float32)

    r = jax.lax.broadcasted_iota(jnp.int32, (N, N), 0)
    c = jax.lax.broadcasted_iota(jnp.int32, (N, N), 1)
    upper = (c > r).astype(jnp.float32)
    # arch 0: strict-upper-triangular node mask (valid DAG);
    # arch 1: all-ones mask -> random lower-tri edges -> should be flagged invalid.
    mask = jnp.stack([upper, jnp.ones((N, N), jnp.float32)], axis=0)

    # plain-JAX reference (computed before the kernel call)
    ref_masked = adj * mask
    ref_edges_mat = (ref_masked > 0.5).astype(jnp.float32)
    ref_count = jnp.sum(ref_edges_mat.reshape(B, -1), axis=1, keepdims=True)
    lower_ref = (r >= c).astype(jnp.float32)
    ref_viol = jnp.sum((ref_edges_mat * lower_ref[None]).reshape(B, -1),
                       axis=1, keepdims=True)
    ref_valid = (ref_viol == 0.0).astype(jnp.float32)

    module = SamplingArchMetricsMeta()
    arch_list = [f"arch_{i}" for i in range(B)]
    masked_adj, edge_count, valid_flag, _ = module(arch_list, adj, mask)
    jax.block_until_ready((masked_adj, edge_count, valid_flag))

    assert masked_adj.shape == (B, N, N) and masked_adj.dtype == adj.dtype
    assert jnp.allclose(masked_adj, ref_masked)
    assert jnp.allclose(edge_count, ref_count)
    assert jnp.allclose(valid_flag, ref_valid)

    print("KERNEL_OK")
</pallas_src>

<mosaic_0001>
module attributes {stable_mosaic.version = 11 : i64} {
  func.func @_arch_metrics_kernel(%arg0: i32, %arg1: memref<2x64xf32, #tpu.memory_space<vmem>>, %arg2: memref<2x64xf32, #tpu.memory_space<vmem>>, %arg3: memref<2x64xf32, #tpu.memory_space<vmem>>, %arg4: memref<2x64xf32, #tpu.memory_space<vmem>>, %arg5: memref<2x2xf32, #tpu.memory_space<vmem>>) attributes {dimension_semantics = [#tpu.dimension_semantics<parallel>], iteration_bounds = array<i64: 1>, scalar_prefetch = 0 : i64, scratch_operands = 0 : i64, tpu.core_type = #tpu.core_type<tc>, window_params = [{transform_indices = @transform_0, window_bounds = array<i64: 2, 64>}, {transform_indices = @transform_1, window_bounds = array<i64: 2, 64>}, {pipeline_mode = #tpu.pipeline_mode<synchronous>, transform_indices = @transform_2, window_bounds = array<i64: 2, 64>}, {transform_indices = @transform_3, window_bounds = array<i64: 2, 64>}, {transform_indices = @transform_4, window_bounds = array<i64: 2, 2>}]} {
    %c0 = arith.constant 0 : index
    %c0_0 = arith.constant 0 : index
    %0 = vector.load %arg1[%c0, %c0_0] : memref<2x64xf32, #tpu.memory_space<vmem>>, vector<2x64xf32>
    %c0_1 = arith.constant 0 : index
    %c0_2 = arith.constant 0 : index
    %1 = vector.load %arg2[%c0_1, %c0_2] : memref<2x64xf32, #tpu.memory_space<vmem>>, vector<2x64xf32>
    %2 = arith.mulf %0, %1 : vector<2x64xf32>
    %c0_3 = arith.constant 0 : index
    %c0_4 = arith.constant 0 : index
    %3 = vector.load %arg4[%c0_3, %c0_4] : memref<2x64xf32, #tpu.memory_space<vmem>>, vector<2x64xf32>
    tpu.vector_store %arg4[%c0_3, %c0_4], %2 {strides = array<i32>} : memref<2x64xf32, #tpu.memory_space<vmem>>, vector<2x64xf32>,
    %cst = arith.constant 5.000000e-01 : f32
    %4 = vector.broadcast %cst : f32 to vector<2x64xf32>
    %5 = arith.cmpf ogt, %2, %4 : vector<2x64xf32>
    %6 = arith.extui %5 : vector<2x64xi1> to vector<2x64xi32>
    %7 = arith.sitofp %6 : vector<2x64xi32> to vector<2x64xf32>
    %c0_5 = arith.constant 0 : index
    %c0_6 = arith.constant 0 : index
    %8 = vector.load %arg3[%c0_5, %c0_6] : memref<2x64xf32, #tpu.memory_space<vmem>>, vector<2x64xf32>
    %cst_7 = arith.constant dense<0.000000e+00> : vector<2x2xf32>
    %9 = tpu.matmul %8, %7, %cst_7 {dimension_numbers = #tpu.dot_dimension_numbers<[1], [1], [0], [0], [0, 0, 1, 0], [], []>} : vector<2x64xf32>, vector<2x64xf32>, vector<2x2xf32> -> vector<2x2xf32>
    %10 = tpu.iota {dimensions = array<i32: 0>} : vector<2x2xi32>
    %cst_8 = arith.constant 5.000000e-01 : f32
    %11 = vector.broadcast %cst_8 : f32 to vector<2x2xf32>
    %12 = arith.cmpf olt, %9, %11 : vector<2x2xf32>
    %13 = arith.extui %12 : vector<2x2xi1> to vector<2x2xi32>
    %14 = arith.sitofp %13 : vector<2x2xi32> to vector<2x2xf32>
    %c0_i32 = arith.constant 0 : i32
    %15 = vector.broadcast %c0_i32 : i32 to vector<2x2xi32>
    %16 = arith.cmpi eq, %10, %15 : vector<2x2xi32>
    %17 = arith.select %16, %9, %14 : vector<2x2xi1>, vector<2x2xf32>
    %c0_9 = arith.constant 0 : index
    %c0_10 = arith.constant 0 : index
    %18 = vector.load %arg5[%c0_9, %c0_10] : memref<2x2xf32, #tpu.memory_space<vmem>>, vector<2x2xf32>
    tpu.vector_store %arg5[%c0_9, %c0_10], %17 {strides = array<i32>} : memref<2x2xf32, #tpu.memory_space<vmem>>, vector<2x2xf32>,
    return
  }
  func.func @transform_0(%arg0: i32) -> (i32, i32) {
    %c0_i32 = arith.constant 0 : i32
    %c0_i32_0 = arith.constant 0 : i32
    return %arg0, %c0_i32 : i32, i32
  }
  func.func @transform_1(%arg0: i32) -> (i32, i32) {
    %c0_i32 = arith.constant 0 : i32
    %c0_i32_0 = arith.constant 0 : i32
    return %arg0, %c0_i32 : i32, i32
  }
  func.func @transform_2(%arg0: i32) -> (i32, i32) {
    %c0_i32 = arith.constant 0 : i32
    %c0_i32_0 = arith.constant 0 : i32
    %c0_i32_1 = arith.constant 0 : i32
    return %c0_i32, %c0_i32_0 : i32, i32
  }
  func.func @transform_3(%arg0: i32) -> (i32, i32) {
    %c0_i32 = arith.constant 0 : i32
    %c0_i32_0 = arith.constant 0 : i32
    return %arg0, %c0_i32 : i32, i32
  }
  func.func @transform_4(%arg0: i32) -> (i32, i32) {
    %c0_i32 = arith.constant 0 : i32
    %c0_i32_0 = arith.constant 0 : i32
    return %c0_i32, %arg0 : i32, i32
  }
}

</mosaic_0001>

<llo_original>
// kernel: _arch_metrics_impl.1
$region0: #{_arch_metrics_impl.1}
  #allocation0 [shape = 'u32[]', space=smem, size = 0x4, offset = 0x4, fixed_abs, tag = 'smem constant byte address 0x4 - core index']
  #allocation1 [shape = 'u32[144,128]{1,0:T(1,128)}', space=vmem, size = 0x12000, scoped, tag = 'internal scratch']
  %s0 = inlined_call_operand.vmem [shape: f32[2,64], index: 0, kind: input, shape index: {}]
  %s1 = inlined_call_operand.vmem [shape: f32[2,64], index: 1, kind: input, shape index: {}]
  %s2 = inlined_call_operand.vmem [shape: f32[2,64], index: 2, kind: input, shape index: {}]
  %s3 = inlined_call_operand.vmem [shape: f32[2,64], index: 3, kind: output, shape index: {0}]
  %s4 = inlined_call_operand.vmem [shape: f32[2,2], index: 4, kind: output, shape index: {1}]
  %5 = xla_tuple %s3, %s4
  %s6 = sld [smem:[#allocation0]]
  $region30: #{_arch_metrics_impl.1} parent=0
    _
  %s8 = ssub.s32 1, %s6
  %s9 = scalar_select 0, %s8, %s6
  // Predicated region
  $region2: #{_arch_metrics_impl.1} parent=0 // pred_check
    _
  $region3: #{_arch_metrics_impl.1} parent=0 // pred_check_branch
    %11 = sbr.rel (0) target = $region5
  $region4: #{_arch_metrics_impl.1} parent=0 // pred_region
    _
  $region5: #{_arch_metrics_impl.1} parent=0 // pred_fallthru
    _
  // Predicated region
  $region6: #{_arch_metrics_impl.1} parent=0 // pred_check
    _
  $region7: #{_arch_metrics_impl.1} parent=0 // pred_check_branch
    %13 = sbr.rel (0) target = $region9
  $region8: #{_arch_metrics_impl.1} parent=0 // pred_region
    _
  $region9: #{_arch_metrics_impl.1} parent=0 // pred_fallthru
    _
  // Predicated region
  $region10: #{_arch_metrics_impl.1} parent=0 // pred_check
    _
  $region11: #{_arch_metrics_impl.1} parent=0 // pred_check_branch
    %15 = sbr.rel (0) target = $region13
  $region12: #{_arch_metrics_impl.1} parent=0 // pred_region
    _
  $region13: #{_arch_metrics_impl.1} parent=0 // pred_fallthru
    _
  %v16 = vld [vmem:[%s0] sm:$0x3]
  %v17 = vld [vmem:[%s1] sm:$0x3]
  %v18 = vmul.f32 %v16, %v17
  %vm19 = vcmask 517120
  %20 = vst.msk [vmem:[%s3] sm:$0x3] %vm19, %v18
  %vm21 = vcmp.gt.f32.partialorder %v18, 0.5
  %v22 = vsel %vm21, 1, 0
  %v23 = vcvt.s32.f32 %v22
  %v24 = vld [vmem:[%s2] sm:$0x3]
  %vm25 = vcmask 523264
  %v27 = vsel %vm25, %v24, 0
  %v30 = vsel %vm25, %v23, 0
  %32 = vmatprep.subr.mxu0 0.0
  %33 = vmatpush1.xpose.msra.mxu0 %v30
  %34 = vmatprep.subr.mxu0 0.0
  %35 = vmatpush1.xpose.msra.mxu0 0.0
  %36 = vmatprep.subr.mxu0 0.0
  %37 = vmatpush1.xpose.msra.mxu0 0.0
  %38 = vmatprep.subr.mxu0 0.0
  %39 = vmatpush1.xpose.msra.mxu0 0.0
  %40 = vmatprep.subr.mxu0 0.0
  %41 = vmatpush1.xpose.msra.mxu0 0.0
  %42 = vmatprep.subr.mxu0 0.0
  %43 = vmatpush1.xpose.msra.mxu0 0.0
  %44 = vmatprep.subr.mxu0 0.0
  %45 = vmatpush1.xpose.msra.mxu0 0.0
  %46 = vmatprep.subr.mxu0 0.0
  %47 = vmatpush1.xpose.msra.mxu0 0.0
  %48 = vmatprep.subr.mxu0 0.0
  %49 = vmatpush1.xpose.msra.mxu0 0.0
  %50 = vmatprep.subr.mxu0 0.0
  %51 = vmatpush1.xpose.msra.mxu0 0.0
  %52 = vmatprep.subr.mxu0 0.0
  %53 = vmatpush1.xpose.msra.mxu0 0.0
  %54 = vmatprep.subr.mxu0 0.0
  %55 = vmatpush1.xpose.msra.mxu0 0.0
  %56 = vmatprep.subr.mxu0 0.0
  %57 = vmatpush1.xpose.msra.mxu0 0.0
  %58 = vmatprep.subr.mxu0 0.0
  %59 = vmatpush1.xpose.msra.mxu0 0.0
  %60 = vmatprep.subr.mxu0 0.0
  %61 = vmatpush1.xpose.msra.mxu0 0.0
  %62 = vmatprep.subr.mxu0 0.0
  %63 = vmatpush1.xpose.msra.mxu0 0.0
  %64 = vmatprep.subr.mxu0 0.0
  %65 = vmatpush1.xpose.msra.mxu0 0.0
  %66 = vmatprep.subr.mxu0 0.0
  %67 = vmatpush1.xpose.msra.mxu0 0.0
  %68 = vmatprep.subr.mxu0 0.0
  %69 = vmatpush1.xpose.msra.mxu0 0.0
  %70 = vmatprep.subr.mxu0 0.0
  %71 = vmatpush1.xpose.msra.mxu0 0.0
  %72 = vmatprep.subr.mxu0 0.0
  %73 = vmatpush1.xpose.msra.mxu0 0.0
  %74 = vmatprep.subr.mxu0 0.0
  %75 = vmatpush1.xpose.msra.mxu0 0.0
  %76 = vmatprep.subr.mxu0 0.0
  %77 = vmatpush1.xpose.msra.mxu0 0.0
  %78 = vmatprep.subr.mxu0 0.0
  %79 = vmatpush1.xpose.msra.mxu0 0.0
  %80 = vmatprep.subr.mxu0 0.0
  %81 = vmatpush1.xpose.msra.mxu0 0.0
  %82 = vmatprep.subr.mxu0 0.0
  %83 = vmatpush1.xpose.msra.mxu0 0.0
  %84 = vmatprep.subr.mxu0 0.0
  %85 = vmatpush1.xpose.msra.mxu0 0.0
  %86 = vmatprep.subr.mxu0 0.0
  %87 = vmatpush1.xpose.msra.mxu0 0.0
  %88 = vmatprep.subr.mxu0 0.0
  %89 = vmatpush1.xpose.msra.mxu0 0.0
  %90 = vmatprep.subr.mxu0 0.0
  %91 = vmatpush1.xpose.msra.mxu0 0.0
  %92 = vmatprep.subr.mxu0 0.0
  %93 = vmatpush1.xpose.msra.mxu0 0.0
  %94 = vmatprep.subr.mxu0 0.0
  %95 = vmatpush1.xpose.msra.mxu0 0.0
  %96 = vmatprep.mubr.f32.mxu0 0.0
  %97 = vmatmul.mubr.f32.gmra.mrb[0].mxu0 %v27
  %v98 = vpop.f32.mrb[0].mxu0
  %v99 = vadd.f32 0.0, %v98
  %v100 = vpop.f32.mrb[0].mxu0
  %101 = vdwg.mxu0
  %v102 = vlaneseq
  %v103 = vshrl.u32 %v102, 7
  %vm104 = vcmp.lt.f32.partialorder %v99, 0.5
  %v105 = vsel %vm104, 1, 0
  %v106 = vcvt.s32.f32 %v105
  %vm107 = vcmp.eq.s32.totalorder %v103, 0
  %v108 = vsel %vm107, %v99, %v106
  %vm109 = vcmask 9216
  %110 = vst.msk [vmem:[%s4] sm:$0x3] %vm109, %v108
  // Predicated region
  $region14: #{_arch_metrics_impl.1} parent=0 // pred_check
    _
  $region15: #{_arch_metrics_impl.1} parent=0 // pred_check_branch
    %112 = sbr.rel (0) target = $region17
  $region16: #{_arch_metrics_impl.1} parent=0 // pred_region
    _
  $region17: #{_arch_metrics_impl.1} parent=0 // pred_fallthru
    _
  // Predicated region
  $region18: #{_arch_metrics_impl.1} parent=0 // pred_check
    _
  $region19: #{_arch_metrics_impl.1} parent=0 // pred_check_branch
    %114 = sbr.rel (0) target = $region21
  $region20: #{_arch_metrics_impl.1} parent=0 // pred_region
    _
  $region21: #{_arch_metrics_impl.1} parent=0 // pred_fallthru
    _
  // Predicated region
  $region22: #{_arch_metrics_impl.1} parent=0 // pred_check
    _
  $region23: #{_arch_metrics_impl.1} parent=0 // pred_check_branch
    %116 = sbr.rel (0) target = $region25
  $region24: #{_arch_metrics_impl.1} parent=0 // pred_region
    _
  $region25: #{_arch_metrics_impl.1} parent=0 // pred_fallthru
    _
  // Predicated region
  $region26: #{_arch_metrics_impl.1} parent=0 // pred_check
    _
  $region27: #{_arch_metrics_impl.1} parent=0 // pred_check_branch
    %118 = sbr.rel (0) target = $region29
  $region28: #{_arch_metrics_impl.1} parent=0 // pred_region
    _
  $region29: #{_arch_metrics_impl.1} parent=0 // pred_fallthru
    _

</llo_original>
